<compile_context>
chip_gen: v7x
topology: tpu7x:2x2x1
jax: 0.10.0
libtpu: 0.0.40
codegen_flags: <defaults>
</compile_context>

<pallas_src>
import functools

import jax
import jax.numpy as jnp
from jax.experimental import pallas as pl
from jax.experimental.pallas import tpu as pltpu


def coord_att_kernel(x_ref, pool_ref, eh_ref, ew_ref, w1_ref, b1_ref,
                     w2_ref, b2_ref, w3_ref, b3_ref, out_ref, *, h):
    """Processes one (block_n, C, H*W) tile; everything stays lane-dense."""
    block_n = x_ref.shape[0]
    pool = pool_ref[...]          # (H*W, H+W)  avg-pool + cat, as one matmul
    eh = eh_ref[...]              # (H,  H*W)   0/1 expansion of g_h over W
    ew = ew_ref[...]              # (W,  H*W)   0/1 expansion of g_w over H
    w1 = w1_ref[...]              # (mip, C)    conv1 with BN folded in
    b1 = b1_ref[...]              # (mip, 1)
    w2 = w2_ref[...]              # (C, mip)
    b2 = b2_ref[...]              # (C, 1)
    w3 = w3_ref[...]              # (C, mip)
    b3 = b3_ref[...]              # (C, 1)

    for i in range(block_n):      # static unroll over samples in this block
        xi = x_ref[i]                                                  # (C, H*W)
        # pooled = [mean over W | mean over H]  -> (C, H+W)  (== pool_h cat pool_w)
        pooled = jnp.dot(xi, pool, preferred_element_type=jnp.float32)
        # conv1 (1x1) + folded BatchNorm, then h_swish.
        y = jnp.dot(w1, pooled, preferred_element_type=jnp.float32) + b1
        y = y * (jnp.clip(y + 3.0, 0.0, 6.0) * (1.0 / 6.0))            # (mip, H+W)
        y_h = y[:, :h]                                                 # (mip, H)
        y_w = y[:, h:]                                                 # (mip, W)
        g_h = jax.nn.sigmoid(
            jnp.dot(w2, y_h, preferred_element_type=jnp.float32) + b2)  # (C, H)
        g_w = jax.nn.sigmoid(
            jnp.dot(w3, y_w, preferred_element_type=jnp.float32) + b3)  # (C, W)
        # Expand gates to a lane-dense (C, H*W) gate and apply in input dtype.
        gate = (jnp.dot(g_h, eh, preferred_element_type=jnp.float32) *
                jnp.dot(g_w, ew, preferred_element_type=jnp.float32))   # (C, H*W)
        out_ref[i] = (xi * gate.astype(xi.dtype)).astype(out_ref.dtype)


def coord_att(x, w1, b1, scale, shift, w2, b2, w3, b3, *, block_n=None):
    N, C, H, W = x.shape
    HW = H * W

    # Fold eval-mode BatchNorm (scale/shift) + conv1 bias into conv1.
    w1f = (w1 * scale).astype(jnp.float32)            # (mip, C)
    b1f = (b1 * scale + shift).astype(jnp.float32)    # (mip, 1)

    # Host-built constant matrices (loaded once, resident across grid steps).
    lin = jnp.arange(HW)
    h_of = lin // W
    w_of = lin % W
    pool = jnp.zeros((HW, H + W), jnp.float32)
    pool = pool.at[lin, h_of].set(1.0 / W)            # x_h = mean over W
    pool = pool.at[lin, H + w_of].set(1.0 / H)        # x_w = mean over H
    pool = pool.astype(x.dtype)
    eh = (h_of[None, :] == jnp.arange(H)[:, None]).astype(jnp.float32)   # (H, HW)
    ew = (w_of[None, :] == jnp.arange(W)[:, None]).astype(jnp.float32)   # (W, HW)

    x2 = x.reshape(N, C, HW)                          # lane-dense view (free)

    if block_n is None:
        per_sample = C * HW * x.dtype.itemsize
        # ~4 MiB of real data per block, capped to bound in-kernel unroll.
        cap = max(1, min(8, (4 * 1024 * 1024) // max(1, per_sample)))
        block_n = min(N, cap)
        if block_n == N and N > 1:
            block_n = N // 2          # keep >= 2 grid steps for 2-TC chips (v7x)
        while N % block_n != 0:
            block_n -= 1
    grid = (N // block_n,)

    def fixed(arr):
        nd = arr.ndim
        return pl.BlockSpec(arr.shape, lambda n, _nd=nd: (0,) * _nd)

    out = pl.pallas_call(
        functools.partial(coord_att_kernel, h=H),
        out_shape=jax.ShapeDtypeStruct((N, C, HW), x.dtype),
        grid_spec=pltpu.PrefetchScalarGridSpec(
            num_scalar_prefetch=0,
            grid=grid,
            in_specs=[
                pl.BlockSpec((block_n, C, HW), lambda n: (n, 0, 0)),
                fixed(pool), fixed(eh), fixed(ew),
                fixed(w1f), fixed(b1f),
                fixed(w2), fixed(b2), fixed(w3), fixed(b3),
            ],
            out_specs=pl.BlockSpec((block_n, C, HW), lambda n: (n, 0, 0)),
        ),
        compiler_params=pltpu.CompilerParams(
            dimension_semantics=("parallel",),
            vmem_limit_bytes=64 * 1024 * 1024),
    )(x2, pool, eh, ew, w1f, b1f, w2, b2, w3, b3)

    return out.reshape(N, C, H, W)


def reference(x, w1, b1, scale, shift, w2, b2, w3, b3):
    """Pure-JAX reference mirroring the PyTorch forward (BN in eval mode)."""
    x = x.astype(jnp.float32)
    H = x.shape[2]
    x_h = jnp.mean(x, axis=3)                      # pool_h -> (N, C, H)
    x_w = jnp.mean(x, axis=2)                      # pool_w -> (N, C, W)
    y = jnp.concatenate([x_h, x_w], axis=2)        # cat    -> (N, C, H+W)
    y = jnp.einsum('mc,ncl->nml', w1, y) + b1[None]
    y = y * scale[None] + shift[None]              # BatchNorm2d (eval)
    y = y * (jnp.clip(y + 3.0, 0.0, 6.0) / 6.0)    # h_swish
    y_h, y_w = y[:, :, :H], y[:, :, H:]
    g_h = jax.nn.sigmoid(jnp.einsum('om,nml->nol', w2, y_h) + b2[None])  # (N, C, H)
    g_w = jax.nn.sigmoid(jnp.einsum('om,nml->nol', w3, y_w) + b3[None])  # (N, C, W)
    return x * g_w[:, :, None, :] * g_h[:, :, :, None]


if __name__ == "__main__":
    key = jax.random.PRNGKey(0)
    N, C, H, W = 2, 4, 16, 16        # inp = oup = C (final product requires oup == C)
    groups = 32
    mip = max(8, C // groups)

    ks = jax.random.split(key, 11)
    x = jax.random.normal(ks[0], (N, C, H, W), dtype=jnp.float32)

    # conv1: C -> mip, 1x1
    w1 = 0.3 * jax.random.normal(ks[1], (mip, C), dtype=jnp.float32)
    b1 = 0.1 * jax.random.normal(ks[2], (mip, 1), dtype=jnp.float32)
    # bn1 (eval-mode): gamma/beta/running stats -> scale/shift
    gamma = 1.0 + 0.1 * jax.random.normal(ks[3], (mip, 1), dtype=jnp.float32)
    beta = 0.1 * jax.random.normal(ks[4], (mip, 1), dtype=jnp.float32)
    run_mean = 0.1 * jax.random.normal(ks[5], (mip, 1), dtype=jnp.float32)
    run_var = 1.0 + 0.1 * jnp.abs(jax.random.normal(ks[6], (mip, 1), dtype=jnp.float32))
    eps = 1e-5
    scale = gamma / jnp.sqrt(run_var + eps)
    shift = beta - run_mean * scale
    # conv2 / conv3: mip -> oup(=C), 1x1
    w2 = 0.3 * jax.random.normal(ks[7], (C, mip), dtype=jnp.float32)
    b2 = 0.1 * jax.random.normal(ks[8], (C, 1), dtype=jnp.float32)
    w3 = 0.3 * jax.random.normal(ks[9], (C, mip), dtype=jnp.float32)
    b3 = 0.1 * jax.random.normal(ks[10], (C, 1), dtype=jnp.float32)

    out = coord_att(x, w1, b1, scale, shift, w2, b2, w3, b3)
    out = jax.block_until_ready(out)

    ref = reference(x, w1, b1, scale, shift, w2, b2, w3, b3)
    assert out.shape == (N, C, H, W)
    err = float(jnp.max(jnp.abs(out - ref)))
    assert jnp.allclose(out, ref, atol=2e-5, rtol=2e-5), f"max err {err}"

    print("KERNEL_OK")
</pallas_src>

<mosaic_0001>
module attributes {stable_mosaic.version = 11 : i64} {
  func.func @coord_att_kernel(%arg0: i32, %arg1: memref<1x4x256xf32, #tpu.memory_space<vmem>>, %arg2: memref<256x32xf32, #tpu.memory_space<vmem>>, %arg3: memref<16x256xf32, #tpu.memory_space<vmem>>, %arg4: memref<16x256xf32, #tpu.memory_space<vmem>>, %arg5: memref<8x4xf32, #tpu.memory_space<vmem>>, %arg6: memref<8x1xf32, #tpu.memory_space<vmem>>, %arg7: memref<4x8xf32, #tpu.memory_space<vmem>>, %arg8: memref<4x1xf32, #tpu.memory_space<vmem>>, %arg9: memref<4x8xf32, #tpu.memory_space<vmem>>, %arg10: memref<4x1xf32, #tpu.memory_space<vmem>>, %arg11: memref<1x4x256xf32, #tpu.memory_space<vmem>>) attributes {dimension_semantics = [#tpu.dimension_semantics<parallel>], iteration_bounds = array<i64: 2>, scalar_prefetch = 0 : i64, scratch_operands = 0 : i64, tpu.core_type = #tpu.core_type<tc>, window_params = [{transform_indices = @transform_0, window_bounds = array<i64: 1, 4, 256>}, {pipeline_mode = #tpu.pipeline_mode<synchronous>, transform_indices = @transform_1, window_bounds = array<i64: 256, 32>}, {pipeline_mode = #tpu.pipeline_mode<synchronous>, transform_indices = @transform_2, window_bounds = array<i64: 16, 256>}, {pipeline_mode = #tpu.pipeline_mode<synchronous>, transform_indices = @transform_3, window_bounds = array<i64: 16, 256>}, {pipeline_mode = #tpu.pipeline_mode<synchronous>, transform_indices = @transform_4, window_bounds = array<i64: 8, 4>}, {pipeline_mode = #tpu.pipeline_mode<synchronous>, transform_indices = @transform_5, window_bounds = array<i64: 8, 1>}, {pipeline_mode = #tpu.pipeline_mode<synchronous>, transform_indices = @transform_6, window_bounds = array<i64: 4, 8>}, {pipeline_mode = #tpu.pipeline_mode<synchronous>, transform_indices = @transform_7, window_bounds = array<i64: 4, 1>}, {pipeline_mode = #tpu.pipeline_mode<synchronous>, transform_indices = @transform_8, window_bounds = array<i64: 4, 8>}, {pipeline_mode = #tpu.pipeline_mode<synchronous>, transform_indices = @transform_9, window_bounds = array<i64: 4, 1>}, {transform_indices = @transform_10, window_bounds = array<i64: 1, 4, 256>}]} {
    %c0 = arith.constant 0 : index
    %c0_0 = arith.constant 0 : index
    %0 = vector.load %arg2[%c0, %c0_0] : memref<256x32xf32, #tpu.memory_space<vmem>>, vector<256x32xf32>
    %c0_1 = arith.constant 0 : index
    %c0_2 = arith.constant 0 : index
    %1 = vector.load %arg3[%c0_1, %c0_2] : memref<16x256xf32, #tpu.memory_space<vmem>>, vector<16x256xf32>
    %c0_3 = arith.constant 0 : index
    %c0_4 = arith.constant 0 : index
    %2 = vector.load %arg4[%c0_3, %c0_4] : memref<16x256xf32, #tpu.memory_space<vmem>>, vector<16x256xf32>
    %c0_5 = arith.constant 0 : index
    %c0_6 = arith.constant 0 : index
    %3 = vector.load %arg5[%c0_5, %c0_6] : memref<8x4xf32, #tpu.memory_space<vmem>>, vector<8x4xf32>
    %c0_7 = arith.constant 0 : index
    %c0_8 = arith.constant 0 : index
    %4 = vector.load %arg6[%c0_7, %c0_8] : memref<8x1xf32, #tpu.memory_space<vmem>>, vector<8x1xf32>
    %c0_9 = arith.constant 0 : index
    %c0_10 = arith.constant 0 : index
    %5 = vector.load %arg7[%c0_9, %c0_10] : memref<4x8xf32, #tpu.memory_space<vmem>>, vector<4x8xf32>
    %c0_11 = arith.constant 0 : index
    %c0_12 = arith.constant 0 : index
    %6 = vector.load %arg8[%c0_11, %c0_12] : memref<4x1xf32, #tpu.memory_space<vmem>>, vector<4x1xf32>
    %c0_13 = arith.constant 0 : index
    %c0_14 = arith.constant 0 : index
    %7 = vector.load %arg9[%c0_13, %c0_14] : memref<4x8xf32, #tpu.memory_space<vmem>>, vector<4x8xf32>
    %c0_15 = arith.constant 0 : index
    %c0_16 = arith.constant 0 : index
    %8 = vector.load %arg10[%c0_15, %c0_16] : memref<4x1xf32, #tpu.memory_space<vmem>>, vector<4x1xf32>
    %c0_17 = arith.constant 0 : index
    %c0_18 = arith.constant 0 : index
    %c0_19 = arith.constant 0 : index
    %9 = vector.load %arg1[%c0_17, %c0_18, %c0_19] : memref<1x4x256xf32, #tpu.memory_space<vmem>>, vector<1x4x256xf32>
    %10 = vector.shape_cast %9 : vector<1x4x256xf32> to vector<4x256xf32>
    %cst = arith.constant dense<0.000000e+00> : vector<4x32xf32>
    %11 = tpu.matmul %10, %0, %cst {dimension_numbers = #tpu.dot_dimension_numbers<[1], [0], [0], [1], [0, 0, 1, 1], [], []>} : vector<4x256xf32>, vector<256x32xf32>, vector<4x32xf32> -> vector<4x32xf32>
    %cst_20 = arith.constant dense<0.000000e+00> : vector<8x32xf32>
    %12 = tpu.matmul %3, %11, %cst_20 {dimension_numbers = #tpu.dot_dimension_numbers<[1], [0], [0], [1], [0, 0, 1, 1], [], []>} : vector<8x4xf32>, vector<4x32xf32>, vector<8x32xf32> -> vector<8x32xf32>
    %13 = vector.broadcast %4 : vector<8x1xf32> to vector<8x32xf32>
    %14 = arith.addf %12, %13 : vector<8x32xf32>
    %cst_21 = arith.constant 3.000000e+00 : f32
    %15 = vector.broadcast %cst_21 : f32 to vector<8x32xf32>
    %16 = arith.addf %14, %15 : vector<8x32xf32>
    %cst_22 = arith.constant 0.000000e+00 : f32
    %cst_23 = arith.constant 6.000000e+00 : f32
    %17 = vector.broadcast %cst_22 : f32 to vector<8x32xf32>
    %18 = arith.maximumf %17, %16 : vector<8x32xf32>
    %19 = vector.broadcast %cst_23 : f32 to vector<8x32xf32>
    %20 = arith.minimumf %19, %18 : vector<8x32xf32>
    %cst_24 = arith.constant 0.166666672 : f32
    %21 = vector.broadcast %cst_24 : f32 to vector<8x32xf32>
    %22 = arith.mulf %20, %21 : vector<8x32xf32>
    %23 = arith.mulf %14, %22 : vector<8x32xf32>
    %24 = vector.extract_strided_slice %23 {offsets = [0, 0], sizes = [8, 16], strides = [1, 1]} : vector<8x32xf32> to vector<8x16xf32>
    %25 = vector.extract_strided_slice %23 {offsets = [0, 16], sizes = [8, 16], strides = [1, 1]} : vector<8x32xf32> to vector<8x16xf32>
    %cst_25 = arith.constant dense<0.000000e+00> : vector<4x16xf32>
    %26 = tpu.matmul %5, %24, %cst_25 {dimension_numbers = #tpu.dot_dimension_numbers<[1], [0], [0], [1], [0, 0, 1, 1], [], []>} : vector<4x8xf32>, vector<8x16xf32>, vector<4x16xf32> -> vector<4x16xf32>
    %27 = vector.broadcast %6 : vector<4x1xf32> to vector<4x16xf32>
    %28 = arith.addf %26, %27 : vector<4x16xf32>
    %29 = arith.negf %28 : vector<4x16xf32>
    %30 = math.exp %29 : vector<4x16xf32>
    %cst_26 = arith.constant 1.000000e+00 : f32
    %31 = vector.broadcast %cst_26 : f32 to vector<4x16xf32>
    %32 = arith.addf %31, %30 : vector<4x16xf32>
    %33 = arith.divf %31, %32 : vector<4x16xf32>
    %cst_27 = arith.constant dense<0.000000e+00> : vector<4x16xf32>
    %34 = tpu.matmul %7, %25, %cst_27 {dimension_numbers = #tpu.dot_dimension_numbers<[1], [0], [0], [1], [0, 0, 1, 1], [], []>} : vector<4x8xf32>, vector<8x16xf32>, vector<4x16xf32> -> vector<4x16xf32>
    %35 = vector.broadcast %8 : vector<4x1xf32> to vector<4x16xf32>
    %36 = arith.addf %34, %35 : vector<4x16xf32>
    %37 = arith.negf %36 : vector<4x16xf32>
    %38 = math.exp %37 : vector<4x16xf32>
    %cst_28 = arith.constant 1.000000e+00 : f32
    %39 = vector.broadcast %cst_28 : f32 to vector<4x16xf32>
    %40 = arith.addf %39, %38 : vector<4x16xf32>
    %41 = arith.divf %39, %40 : vector<4x16xf32>
    %cst_29 = arith.constant dense<0.000000e+00> : vector<4x256xf32>
    %42 = tpu.matmul %33, %1, %cst_29 {dimension_numbers = #tpu.dot_dimension_numbers<[1], [0], [0], [1], [0, 0, 1, 1], [], []>} : vector<4x16xf32>, vector<16x256xf32>, vector<4x256xf32> -> vector<4x256xf32>
    %cst_30 = arith.constant dense<0.000000e+00> : vector<4x256xf32>
    %43 = tpu.matmul %41, %2, %cst_30 {dimension_numbers = #tpu.dot_dimension_numbers<[1], [0], [0], [1], [0, 0, 1, 1], [], []>} : vector<4x16xf32>, vector<16x256xf32>, vector<4x256xf32> -> vector<4x256xf32>
    %44 = arith.mulf %42, %43 : vector<4x256xf32>
    %45 = arith.mulf %10, %44 : vector<4x256xf32>
    %c0_31 = arith.constant 0 : index
    %c0_32 = arith.constant 0 : index
    %c0_33 = arith.constant 0 : index
    %46 = vector.load %arg11[%c0_31, %c0_32, %c0_33] : memref<1x4x256xf32, #tpu.memory_space<vmem>>, vector<1x4x256xf32>
    %47 = vector.shape_cast %46 : vector<1x4x256xf32> to vector<4x256xf32>
    %48 = vector.shape_cast %45 : vector<4x256xf32> to vector<1x4x256xf32>
    tpu.vector_store %arg11[%c0_31, %c0_32, %c0_33], %48 {strides = array<i32>} : memref<1x4x256xf32, #tpu.memory_space<vmem>>, vector<1x4x256xf32>,
    return
  }
  func.func @transform_0(%arg0: i32) -> (i32, i32, i32) {
    %c0_i32 = arith.constant 0 : i32
    %c0_i32_0 = arith.constant 0 : i32
    %c0_i32_1 = arith.constant 0 : i32
    return %arg0, %c0_i32, %c0_i32_0 : i32, i32, i32
  }
  func.func @transform_1(%arg0: i32) -> (i32, i32) {
    %c0_i32 = arith.constant 0 : i32
    %c0_i32_0 = arith.constant 0 : i32
    %c0_i32_1 = arith.constant 0 : i32
    return %c0_i32, %c0_i32_0 : i32, i32
  }
  func.func @transform_2(%arg0: i32) -> (i32, i32) {
    %c0_i32 = arith.constant 0 : i32
    %c0_i32_0 = arith.constant 0 : i32
    %c0_i32_1 = arith.constant 0 : i32
    return %c0_i32, %c0_i32_0 : i32, i32
  }
  func.func @transform_3(%arg0: i32) -> (i32, i32) {
    %c0_i32 = arith.constant 0 : i32
    %c0_i32_0 = arith.constant 0 : i32
    %c0_i32_1 = arith.constant 0 : i32
    return %c0_i32, %c0_i32_0 : i32, i32
  }
  func.func @transform_4(%arg0: i32) -> (i32, i32) {
    %c0_i32 = arith.constant 0 : i32
    %c0_i32_0 = arith.constant 0 : i32
    %c0_i32_1 = arith.constant 0 : i32
    return %c0_i32, %c0_i32_0 : i32, i32
  }
  func.func @transform_5(%arg0: i32) -> (i32, i32) {
    %c0_i32 = arith.constant 0 : i32
    %c0_i32_0 = arith.constant 0 : i32
    %c0_i32_1 = arith.constant 0 : i32
    return %c0_i32, %c0_i32_0 : i32, i32
  }
  func.func @transform_6(%arg0: i32) -> (i32, i32) {
    %c0_i32 = arith.constant 0 : i32
    %c0_i32_0 = arith.constant 0 : i32
    %c0_i32_1 = arith.constant 0 : i32
    return %c0_i32, %c0_i32_0 : i32, i32
  }
  func.func @transform_7(%arg0: i32) -> (i32, i32) {
    %c0_i32 = arith.constant 0 : i32
    %c0_i32_0 = arith.constant 0 : i32
    %c0_i32_1 = arith.constant 0 : i32
    return %c0_i32, %c0_i32_0 : i32, i32
  }
  func.func @transform_8(%arg0: i32) -> (i32, i32) {
    %c0_i32 = arith.constant 0 : i32
    %c0_i32_0 = arith.constant 0 : i32
    %c0_i32_1 = arith.constant 0 : i32
    return %c0_i32, %c0_i32_0 : i32, i32
  }
  func.func @transform_9(%arg0: i32) -> (i32, i32) {
    %c0_i32 = arith.constant 0 : i32
    %c0_i32_0 = arith.constant 0 : i32
    %c0_i32_1 = arith.constant 0 : i32
    return %c0_i32, %c0_i32_0 : i32, i32
  }
  func.func @transform_10(%arg0: i32) -> (i32, i32, i32) {
    %c0_i32 = arith.constant 0 : i32
    %c0_i32_0 = arith.constant 0 : i32
    %c0_i32_1 = arith.constant 0 : i32
    return %arg0, %c0_i32, %c0_i32_0 : i32, i32, i32
  }
}

</mosaic_0001>

<llo_original>
// kernel: tpu_custom_call.1
$region0: #{tpu_custom_call.1}
  #allocation0 [shape = 'u32[]', space=smem, size = 0x4, offset = 0x4, fixed_abs, tag = 'smem constant byte address 0x4 - core index']
  #allocation1 [shape = 'u32[144,128]{1,0:T(1,128)}', space=vmem, size = 0x12000, scoped, tag = 'internal scratch']
  %s0 = inlined_call_operand.hbm [shape: f32[2,4,256], index: 0, kind: input, shape index: {}]
  %s1 = inlined_call_operand.hbm [shape: f32[256,32], index: 1, kind: input, shape index: {}]
  %s2 = inlined_call_operand.hbm [shape: f32[16,256], index: 2, kind: input, shape index: {}]
  %s3 = inlined_call_operand.hbm [shape: f32[16,256], index: 3, kind: input, shape index: {}]
  %s4 = inlined_call_operand.hbm [shape: f32[8,4], index: 4, kind: input, shape index: {}]
  %s5 = inlined_call_operand.hbm [shape: f32[8,1], index: 5, kind: input, shape index: {}]
  %s6 = inlined_call_operand.hbm [shape: f32[4,8], index: 6, kind: input, shape index: {}]
  %s7 = inlined_call_operand.hbm [shape: f32[4,1], index: 7, kind: input, shape index: {}]
  %s8 = inlined_call_operand.hbm [shape: f32[4,8], index: 8, kind: input, shape index: {}]
  %s9 = inlined_call_operand.hbm [shape: f32[4,1], index: 9, kind: input, shape index: {}]
  %s10 = inlined_call_operand.hbm [shape: f32[2,4,256], index: 10, kind: output, shape index: {}]
  %s11 = sld [smem:[#allocation0]]
  $region113: #{tpu_custom_call.1} parent=0
    _
  %s13 = ssub.s32 1, %s11
  %s14 = scalar_select 0, %s13, %s11
  $region1: #{tpu_custom_call.1} parent=0
    #allocation2 [shape = 'u8[8192]{0}', space=vmem, size = 0x2000, scoped, tag = 'input window, operand 0']
    #allocation3 [shape = 's32[2]{0}', space=sflag, size = 0x8, scoped, tag = 'scoped memory for tpu_custom_call.1']
    #allocation4 [shape = 's32[2]{0}', space=sflag, size = 0x8, scoped, tag = 'scoped memory for tpu_custom_call.1']
    #allocation5 [shape = 'u8[131072]{0}', space=vmem, size = 0x20000, scoped, tag = 'input window, operand 1, single buffered']
    #allocation6 [shape = 's32[1]{0}', space=sflag, size = 0x4, scoped, tag = 'scoped memory for tpu_custom_call.1']
    #allocation7 [shape = 'u8[16384]{0}', space=vmem, size = 0x4000, scoped, tag = 'input window, operand 2, single buffered']
    #allocation8 [shape = 'u8[16384]{0}', space=vmem, size = 0x4000, scoped, tag = 'input window, operand 3, single buffered']
    #allocation9 [shape = 's32[1]{0}', space=sflag, size = 0x4, scoped, tag = 'scoped memory for tpu_custom_call.1']
    #allocation10 [shape = 'u8[4096]{0}', space=vmem, size = 0x1000, scoped, tag = 'input window, operand 4, single buffered']
    #allocation11 [shape = 'u8[4096]{0}', space=vmem, size = 0x1000, scoped, tag = 'input window, operand 5, single buffered']
    #allocation12 [shape = 's32[1]{0}', space=sflag, size = 0x4, scoped, tag = 'scoped memory for tpu_custom_call.1']
    #allocation13 [shape = 'u8[2048]{0}', space=vmem, size = 0x800, scoped, tag = 'input window, operand 6, single buffered']
    #allocation14 [shape = 'u8[2048]{0}', space=vmem, size = 0x800, scoped, tag = 'input window, operand 7, single buffered']
    #allocation15 [shape = 's32[1]{0}', space=sflag, size = 0x4, scoped, tag = 'scoped memory for tpu_custom_call.1']
    #allocation16 [shape = 'u8[2048]{0}', space=vmem, size = 0x800, scoped, tag = 'input window, operand 8, single buffered']
    #allocation17 [shape = 'u8[2048]{0}', space=vmem, size = 0x800, scoped, tag = 'input window, operand 9, single buffered']
    #allocation18 [shape = 's32[1]{0}', space=sflag, size = 0x4, scoped, tag = 'scoped memory for tpu_custom_call.1']
    #allocation19 [shape = 'u8[8192]{0}', space=vmem, size = 0x2000, scoped, tag = 'output window, operand 0']
    %15 = vsyncpa [#allocation3], 0
    %s16 = scalar_lea.sflag [#allocation3], 1
    %17 = vsyncpa %s16, 0
    %18 = vsyncpa [#allocation6], 0
    %19 = vsyncpa [#allocation9], 0
    %20 = vsyncpa [#allocation12], 0
    %21 = vsyncpa [#allocation15], 0
    %22 = vsyncpa [#allocation18], 0
    %23 = vsyncpa [#allocation4], 0
    %s24 = scalar_lea.sflag [#allocation4], 1
    %25 = vsyncpa %s24, 0
    loop: start=0, step=1, limit=4
    $region2: #{tpu_custom_call.1} parent=1 // loop_pre_header
      _
    $region3: #{tpu_custom_call.1} parent=1 // loop_header
      %s27 = sphi 0, %s31
      %p28 = scmp.ge.s32.totalorder %s27, 4
      %s37 = sphi 0, %s39
      %s40 = sphi 0, %s37
      %s41 = sphi 0, %s40
      %s57 = sphi 0, %s41
      %s61 = sphi 0, %s61
      %s63 = sphi 0, %s61
      %s64 = sphi 0, %s63
      %s78 = sphi 0, %s64
      %s82 = sphi 0, %s82
      %s84 = sphi 0, %s82
      %s85 = sphi 0, %s84
      %s99 = sphi 0, %s85
      %s103 = sphi 0, %s103
      %s105 = sphi 0, %s103
      %s106 = sphi 0, %s105
      %s120 = sphi 0, %s106
      %s124 = sphi 0, %s124
      %s126 = sphi 0, %s124
      %s127 = sphi 0, %s126
      %s141 = sphi 0, %s127
      %s145 = sphi 0, %s145
      %s147 = sphi 0, %s145
      %s148 = sphi 0, %s147
      %s162 = sphi 0, %s148
      %s166 = sphi 0, %s166
      %s168 = sphi 0, %s166
      %s169 = sphi 0, %s168
      %s183 = sphi 0, %s169
      %s187 = sphi 0, %s187
      %s189 = sphi 0, %s187
      %s190 = sphi 0, %s189
      %s204 = sphi 0, %s190
      %s208 = sphi 0, %s208
      %s210 = sphi 0, %s208
      %s211 = sphi 0, %s210
      %s225 = sphi 0, %s211
      %s229 = sphi 0, %s229
      %s231 = sphi 0, %s229
      %s232 = sphi 0, %s231
      %s246 = sphi 0, %s232
      %s252 = sphi 0, %s254
      %s255 = sphi 0, %s252
      %s256 = sphi 0, %s255
      %s272 = sphi 0, %s256
    $region4: #{tpu_custom_call.1} parent=1 // loop_header_branch
      %30 = sbr.rel (%p28) target = $region8
    $region5: #{tpu_custom_call.1} parent=1 // loop_body
      %s32 = ssub.s32 %s27, 1
      %s33 = ssub.s32 %s27, 2
      %s34 = sadd.s32 %s27, 1
      %s35 = ssub.s32 %s27, %s34
      %p36 = scmp.eq.s32.totalorder %s35, 0
      %s38 = sadd.s32 %s37, 1
      %s39 = scalar_select %p36, %s37, %s38
      %p42 = pneg %p36
      %p43 = scmp.eq.s32.totalorder %s27, 1
      %p44 = por %p42, %p43
      %p45 = scmp.ne.s32.totalorder %s37, %s40
      %p46 = scmp.eq.s32.totalorder %s27, 0
      %p47 = por %p45, %p46
      %p48 = scmp.ne.s32.totalorder %s37, %s40
      %p49 = scmp.eq.s32.totalorder %s32, 1
      %p50 = por %p48, %p49
      %p51 = scmp.ne.s32.totalorder %s40, %s41
      %p52 = scmp.eq.s32.totalorder %s32, 0
      %p53 = por %p51, %p52
      %p54 = scmp.ne.s32.totalorder %s40, %s41
      %p55 = scmp.eq.s32.totalorder %s33, 1
      %p56 = por %p54, %p55
      %p58 = scmp.ne.s32.totalorder %s41, %s57
      %p59 = scmp.eq.s32.totalorder %s33, 0
      %p60 = por %p58, %p59
      %s62 = sadd.s32 %s61, 1
      %p65 = scmp.eq.s32.totalorder %s27, 1
      %p66 = scmp.ne.s32.totalorder %s61, %s63
      %p67 = scmp.eq.s32.totalorder %s27, 0
      %p68 = por %p66, %p67
      %p69 = scmp.ne.s32.totalorder %s61, %s63
      %p70 = scmp.eq.s32.totalorder %s32, 1
      %p71 = por %p69, %p70
      %p72 = scmp.ne.s32.totalorder %s63, %s64
      %p73 = scmp.eq.s32.totalorder %s32, 0
      %p74 = por %p72, %p73
      %p75 = scmp.ne.s32.totalorder %s63, %s64
      %p76 = scmp.eq.s32.totalorder %s33, 1
      %p77 = por %p75, %p76
      %p79 = scmp.ne.s32.totalorder %s64, %s78
      %p80 = scmp.eq.s32.totalorder %s33, 0
      %p81 = por %p79, %p80
      %s83 = sadd.s32 %s82, 1
      %p86 = scmp.eq.s32.totalorder %s27, 1
      %p87 = scmp.ne.s32.totalorder %s82, %s84
      %p88 = scmp.eq.s32.totalorder %s27, 0
      %p89 = por %p87, %p88
      %p90 = scmp.ne.s32.totalorder %s82, %s84
      %p91 = scmp.eq.s32.totalorder %s32, 1
      %p92 = por %p90, %p91
      %p93 = scmp.ne.s32.totalorder %s84, %s85
      %p94 = scmp.eq.s32.totalorder %s32, 0
      %p95 = por %p93, %p94
      %p96 = scmp.ne.s32.totalorder %s84, %s85
      %p97 = scmp.eq.s32.totalorder %s33, 1
      %p98 = por %p96, %p97
      %p100 = scmp.ne.s32.totalorder %s85, %s99
      %p101 = scmp.eq.s32.totalorder %s33, 0
      %p102 = por %p100, %p101
      %s104 = sadd.s32 %s103, 1
      %p107 = scmp.eq.s32.totalorder %s27, 1
      %p108 = scmp.ne.s32.totalorder %s103, %s105
      %p109 = scmp.eq.s32.totalorder %s27, 0
      %p110 = por %p108, %p109
      %p111 = scmp.ne.s32.totalorder %s103, %s105
      %p112 = scmp.eq.s32.totalorder %s32, 1
      %p113 = por %p111, %p112
      %p114 = scmp.ne.s32.totalorder %s105, %s106
      %p115 = scmp.eq.s32.totalorder %s32, 0
      %p116 = por %p114, %p115
      %p117 = scmp.ne.s32.totalorder %s105, %s106
      %p118 = scmp.eq.s32.totalorder %s33, 1
      %p119 = por %p117, %p118
      %p121 = scmp.ne.s32.totalorder %s106, %s120
      %p122 = scmp.eq.s32.totalorder %s33, 0
      %p123 = por %p121, %p122
      %s125 = sadd.s32 %s124, 1
      %p128 = scmp.eq.s32.totalorder %s27, 1
      %p129 = scmp.ne.s32.totalorder %s124, %s126
      %p130 = scmp.eq.s32.totalorder %s27, 0
      %p131 = por %p129, %p130
      %p132 = scmp.ne.s32.totalorder %s124, %s126
      %p133 = scmp.eq.s32.totalorder %s32, 1
      %p134 = por %p132, %p133
      %p135 = scmp.ne.s32.totalorder %s126, %s127
      %p136 = scmp.eq.s32.totalorder %s32, 0
      %p137 = por %p135, %p136
      %p138 = scmp.ne.s32.totalorder %s126, %s127
      %p139 = scmp.eq.s32.totalorder %s33, 1
      %p140 = por %p138, %p139
      %p142 = scmp.ne.s32.totalorder %s127, %s141
      %p143 = scmp.eq.s32.totalorder %s33, 0
      %p144 = por %p142, %p143
      %s146 = sadd.s32 %s145, 1
      %p149 = scmp.eq.s32.totalorder %s27, 1
      %p150 = scmp.ne.s32.totalorder %s145, %s147
      %p151 = scmp.eq.s32.totalorder %s27, 0
      %p152 = por %p150, %p151
      %p153 = scmp.ne.s32.totalorder %s145, %s147
      %p154 = scmp.eq.s32.totalorder %s32, 1
      %p155 = por %p153, %p154
      %p156 = scmp.ne.s32.totalorder %s147, %s148
      %p157 = scmp.eq.s32.totalorder %s32, 0
      %p158 = por %p156, %p157
      %p159 = scmp.ne.s32.totalorder %s147, %s148
      %p160 = scmp.eq.s32.totalorder %s33, 1
      %p161 = por %p159, %p160
      %p163 = scmp.ne.s32.totalorder %s148, %s162
      %p164 = scmp.eq.s32.totalorder %s33, 0
      %p165 = por %p163, %p164
      %s167 = sadd.s32 %s166, 1
      %p170 = scmp.eq.s32.totalorder %s27, 1
      %p171 = scmp.ne.s32.totalorder %s166, %s168
      %p172 = scmp.eq.s32.totalorder %s27, 0
      %p173 = por %p171, %p172
      %p174 = scmp.ne.s32.totalorder %s166, %s168
      %p175 = scmp.eq.s32.totalorder %s32, 1
      %p176 = por %p174, %p175
      %p177 = scmp.ne.s32.totalorder %s168, %s169
      %p178 = scmp.eq.s32.totalorder %s32, 0
      %p179 = por %p177, %p178
      %p180 = scmp.ne.s32.totalorder %s168, %s169
      %p181 = scmp.eq.s32.totalorder %s33, 1
      %p182 = por %p180, %p181
      %p184 = scmp.ne.s32.totalorder %s169, %s183
      %p185 = scmp.eq.s32.totalorder %s33, 0
      %p186 = por %p184, %p185
      %s188 = sadd.s32 %s187, 1
      %p191 = scmp.eq.s32.totalorder %s27, 1
      %p192 = scmp.ne.s32.totalorder %s187, %s189
      %p193 = scmp.eq.s32.totalorder %s27, 0
      %p194 = por %p192, %p193
      %p195 = scmp.ne.s32.totalorder %s187, %s189
      %p196 = scmp.eq.s32.totalorder %s32, 1
      %p197 = por %p195, %p196
      %p198 = scmp.ne.s32.totalorder %s189, %s190
      %p199 = scmp.eq.s32.totalorder %s32, 0
      %p200 = por %p198, %p199
      %p201 = scmp.ne.s32.totalorder %s189, %s190
      %p202 = scmp.eq.s32.totalorder %s33, 1
      %p203 = por %p201, %p202
      %p205 = scmp.ne.s32.totalorder %s190, %s204
      %p206 = scmp.eq.s32.totalorder %s33, 0
      %p207 = por %p205, %p206
      %s209 = sadd.s32 %s208, 1
      %p212 = scmp.eq.s32.totalorder %s27, 1
      %p213 = scmp.ne.s32.totalorder %s208, %s210
      %p214 = scmp.eq.s32.totalorder %s27, 0
      %p215 = por %p213, %p214
      %p216 = scmp.ne.s32.totalorder %s208, %s210
      %p217 = scmp.eq.s32.totalorder %s32, 1
      %p218 = por %p216, %p217
      %p219 = scmp.ne.s32.totalorder %s210, %s211
      %p220 = scmp.eq.s32.totalorder %s32, 0
      %p221 = por %p219, %p220
      %p222 = scmp.ne.s32.totalorder %s210, %s211
      %p223 = scmp.eq.s32.totalorder %s33, 1
      %p224 = por %p222, %p223
      %p226 = scmp.ne.s32.totalorder %s211, %s225
      %p227 = scmp.eq.s32.totalorder %s33, 0
      %p228 = por %p226, %p227
      %s230 = sadd.s32 %s229, 1
      %p233 = scmp.eq.s32.totalorder %s27, 1
      %p234 = scmp.ne.s32.totalorder %s229, %s231
      %p235 = scmp.eq.s32.totalorder %s27, 0
      %p236 = por %p234, %p235
      %p237 = scmp.ne.s32.totalorder %s229, %s231
      %p238 = scmp.eq.s32.totalorder %s32, 1
      %p239 = por %p237, %p238
      %p240 = scmp.ne.s32.totalorder %s231, %s232
      %p241 = scmp.eq.s32.totalorder %s32, 0
      %p242 = por %p240, %p241
      %p243 = scmp.ne.s32.totalorder %s231, %s232
      %p244 = scmp.eq.s32.totalorder %s33, 1
      %p245 = por %p243, %p244
      %p247 = scmp.ne.s32.totalorder %s232, %s246
      %p248 = scmp.eq.s32.totalorder %s33, 0
      %p249 = por %p247, %p248
      %s250 = ssub.s32 %s27, %s34
      %p251 = scmp.eq.s32.totalorder %s250, 0
      %s253 = sadd.s32 %s252, 1
      %s254 = scalar_select %p251, %s252, %s253
      %p257 = pneg %p251
      %p258 = scmp.eq.s32.totalorder %s27, 1
      %p259 = por %p257, %p258
      %p260 = scmp.ne.s32.totalorder %s252, %s255
      %p261 = scmp.eq.s32.totalorder %s27, 0
      %p262 = por %p260, %p261
      %p263 = scmp.ne.s32.totalorder %s252, %s255
      %p264 = scmp.eq.s32.totalorder %s32, 1
      %p265 = por %p263, %p264
      %p266 = scmp.ne.s32.totalorder %s255, %s256
      %p267 = scmp.eq.s32.totalorder %s32, 0
      %p268 = por %p266, %p267
      %p269 = scmp.ne.s32.totalorder %s255, %s256
      %p270 = scmp.eq.s32.totalorder %s33, 1
      %p271 = por %p269, %p270
      %p273 = scmp.ne.s32.totalorder %s256, %s272
      %p274 = scmp.eq.s32.totalorder %s33, 0
      %p275 = por %p273, %p274
      %p276 = scmp.le.s32.totalorder 1, %s27
      %p277 = scmp.lt.s32.totalorder %s27, 3
      %p278 = pnand %p276, %p277
      %p279 = pneg %p278
      // Predicated region
      $region9: #{tpu_custom_call.1} parent=5 // pred_check
        _
      $region10: #{tpu_custom_call.1} parent=5 // pred_check_branch
        %281 = sbr.rel (%p278) target = $region12
      $region11: #{tpu_custom_call.1} parent=5 // pred_region
        %s282 = ssub.s32 %s27, 1
        // Predicated region
        $region13: #{tpu_custom_call.1} parent=11 // pred_check
          %p283 = pneg %p74
        $region14: #{tpu_custom_call.1} parent=11 // pred_check_branch
          %285 = sbr.rel (%p283) target = $region16
        $region15: #{tpu_custom_call.1} parent=11 // pred_region
          %s287 = ssub.s32 4096, 4096
          %288 = vsyncadd [#allocation6], %s287
          %s289 = sshll.u32 [#allocation5], 4
          %s290 = int_to_ptr.vmem [resolvable:$true] %s289
          %295 = dma.hbm_to_vmem [thread:$0]  %s1, 4096, %s290, [#allocation6], 128, 128, 8
        $region16: #{tpu_custom_call.1} parent=11 // pred_fallthru
          _
        // Predicated region
        $region17: #{tpu_custom_call.1} parent=11 // pred_check
          %p296 = pneg %p95
        $region18: #{tpu_custom_call.1} parent=11 // pred_check_branch
          %298 = sbr.rel (%p296) target = $region20
        $region19: #{tpu_custom_call.1} parent=11 // pred_region
          %s300 = ssub.s32 512, 512
          %301 = vsyncadd [#allocation6], %s300
          %s302 = sshll.u32 [#allocation7], 4
          %s303 = int_to_ptr.vmem [resolvable:$true] %s302
          %308 = dma.hbm_to_vmem [thread:$0]  %s2, 512, %s303, [#allocation6], 256, 256, 16
        $region20: #{tpu_custom_call.1} parent=11 // pred_fallthru
          _
        // Predicated region
        $region21: #{tpu_custom_call.1} parent=11 // pred_check
          %p309 = pneg %p116
        $region22: #{tpu_custom_call.1} parent=11 // pred_check_branch
          %311 = sbr.rel (%p309) target = $region24
        $region23: #{tpu_custom_call.1} parent=11 // pred_region
          %s313 = ssub.s32 512, 512
          %314 = vsyncadd [#allocation9], %s313
          %s315 = sshll.u32 [#allocation8], 4
          %s316 = int_to_ptr.vmem [resolvable:$true] %s315
          %321 = dma.hbm_to_vmem [thread:$0]  %s3, 512, %s316, [#allocation9], 256, 256, 16
        $region24: #{tpu_custom_call.1} parent=11 // pred_fallthru
          _
        // Predicated region
        $region25: #{tpu_custom_call.1} parent=11 // pred_check
          %p322 = pneg %p137
        $region26: #{tpu_custom_call.1} parent=11 // pred_check_branch
          %324 = sbr.rel (%p322) target = $region28
        $region27: #{tpu_custom_call.1} parent=11 // pred_region
          %s326 = ssub.s32 128, 128
          %327 = vsyncadd [#allocation9], %s326
          %s329 = sshll.u32 [#allocation10], 4
          %s330 = int_to_ptr.vmem [resolvable:$true] %s329
          %332 = dma.hbm_to_vmem [thread:$0]  %s4, 128, %s330, [#allocation9]
        $region28: #{tpu_custom_call.1} parent=11 // pred_fallthru
          _
        // Predicated region
        $region29: #{tpu_custom_call.1} parent=11 // pred_check
          %p333 = pneg %p158
        $region30: #{tpu_custom_call.1} parent=11 // pred_check_branch
          %335 = sbr.rel (%p333) target = $region32
        $region31: #{tpu_custom_call.1} parent=11 // pred_region
          %s337 = ssub.s32 128, 128
          %338 = vsyncadd [#allocation12], %s337
          %s340 = sshll.u32 [#allocation11], 4
          %s341 = int_to_ptr.vmem [resolvable:$true] %s340
          %343 = dma.hbm_to_vmem [thread:$0]  %s5, 128, %s341, [#allocation12]
        $region32: #{tpu_custom_call.1} parent=11 // pred_fallthru
          _
        // Predicated region
        $region33: #{tpu_custom_call.1} parent=11 // pred_check
          %p344 = pneg %p179
        $region34: #{tpu_custom_call.1} parent=11 // pred_check_branch
          %346 = sbr.rel (%p344) target = $region36
        $region35: #{tpu_custom_call.1} parent=11 // pred_region
          %s348 = ssub.s32 64, 64
          %349 = vsyncadd [#allocation12], %s348
          %s351 = sshll.u32 [#allocation13], 4
          %s352 = int_to_ptr.vmem [resolvable:$true] %s351
          %354 = dma.hbm_to_vmem [thread:$0]  %s6, 64, %s352, [#allocation12]
        $region36: #{tpu_custom_call.1} parent=11 // pred_fallthru
          _
        // Predicated region
        $region37: #{tpu_custom_call.1} parent=11 // pred_check
          %p355 = pneg %p200
        $region38: #{tpu_custom_call.1} parent=11 // pred_check_branch
          %357 = sbr.rel (%p355) target = $region40
        $region39: #{tpu_custom_call.1} parent=11 // pred_region
          %s359 = ssub.s32 64, 64
          %360 = vsyncadd [#allocation15], %s359
          %s362 = sshll.u32 [#allocation14], 4
          %s363 = int_to_ptr.vmem [resolvable:$true] %s362
          %365 = dma.hbm_to_vmem [thread:$0]  %s7, 64, %s363, [#allocation15]
        $region40: #{tpu_custom_call.1} parent=11 // pred_fallthru
          _
        // Predicated region
        $region41: #{tpu_custom_call.1} parent=11 // pred_check
          %p366 = pneg %p221
        $region42: #{tpu_custom_call.1} parent=11 // pred_check_branch
          %368 = sbr.rel (%p366) target = $region44
        $region43: #{tpu_custom_call.1} parent=11 // pred_region
          %s370 = ssub.s32 64, 64
          %371 = vsyncadd [#allocation15], %s370
          %s373 = sshll.u32 [#allocation16], 4
          %s374 = int_to_ptr.vmem [resolvable:$true] %s373
          %376 = dma.hbm_to_vmem [thread:$0]  %s8, 64, %s374, [#allocation15]
        $region44: #{tpu_custom_call.1} parent=11 // pred_fallthru
          _
        // Predicated region
        $region45: #{tpu_custom_call.1} parent=11 // pred_check
          %p377 = pneg %p242
        $region46: #{tpu_custom_call.1} parent=11 // pred_check_branch
          %379 = sbr.rel (%p377) target = $region48
        $region47: #{tpu_custom_call.1} parent=11 // pred_region
          %s381 = ssub.s32 64, 64
          %382 = vsyncadd [#allocation18], %s381
          %s384 = sshll.u32 [#allocation17], 4
          %s385 = int_to_ptr.vmem [resolvable:$true] %s384
          %387 = dma.hbm_to_vmem [thread:$0]  %s9, 64, %s385, [#allocation18]
        $region48: #{tpu_custom_call.1} parent=11 // pred_fallthru
          _
      $region12: #{tpu_custom_call.1} parent=5 // pred_fallthru
        _
      %p388 = scmp.lt.s32.totalorder %s27, 2
      // Predicated region
      $region49: #{tpu_custom_call.1} parent=5 // pred_check
        %p389 = pneg %p388
      $region50: #{tpu_custom_call.1} parent=5 // pred_check_branch
        %391 = sbr.rel (%p389) target = $region52
      $region51: #{tpu_custom_call.1} parent=5 // pred_region
        // Predicated region
        $region53: #{tpu_custom_call.1} parent=51 // pred_check
          %p392 = pneg %p47
        $region54: #{tpu_custom_call.1} parent=51 // pred_check_branch
          %394 = sbr.rel (%p392) target = $region56
        $region55: #{tpu_custom_call.1} parent=51 // pred_region
          %s395 = sand.u32 %s37, 1
          %s396 = scalar_lea.sflag [#allocation3], %s395
          %s397 = sand.u32 %s37, 1
          %s398 = smul.addr %s397, 8
          %s399 = scalar_lea.vmem [#allocation2], %s398
          %s401 = ssub.s32 128, 128
          %402 = vsyncadd %s396, %s401
          %s403 = smul.addr %s27, 2
          %s404 = smul.addr %s403, 64
          %s405 = scalar_lea.hbm %s0, %s404
          %s407 = sshll.u32 %s399, 4
          %s408 = int_to_ptr.vmem [resolvable:$true] %s407
          %410 = dma.hbm_to_vmem [thread:$0]  %s405, 128, %s408, %s396
        $region56: #{tpu_custom_call.1} parent=51 // pred_fallthru
          _
      $region52: #{tpu_custom_call.1} parent=5 // pred_fallthru
        _
      %p411 = scmp.le.s32.totalorder 1, %s27
      %p412 = scmp.lt.s32.totalorder %s27, 3
      %p413 = pnand %p411, %p412
      %p414 = pneg %p413
      // Predicated region
      $region57: #{tpu_custom_call.1} parent=5 // pred_check
        _
      $region58: #{tpu_custom_call.1} parent=5 // pred_check_branch
        %416 = sbr.rel (%p413) target = $region60
      $region59: #{tpu_custom_call.1} parent=5 // pred_region
        %s417 = ssub.s32 %s27, 1
        %s418 = sand.u32 %s40, 1
        %s419 = scalar_lea.sflag [#allocation3], %s418
        %s420 = sand.u32 %s40, 1
        %s421 = smul.addr %s420, 8
        %s422 = scalar_lea.vmem [#allocation2], %s421
        // Predicated region
        $region61: #{tpu_custom_call.1} parent=59 // pred_check
          %p423 = pneg %p53
        $region62: #{tpu_custom_call.1} parent=59 // pred_check_branch
          %425 = sbr.rel (%p423) target = $region64
        $region63: #{tpu_custom_call.1} parent=59 // pred_region
          %426 = dma.done %s419, 128
        $region64: #{tpu_custom_call.1} parent=59 // pred_fallthru
          _
        // Predicated region
        $region65: #{tpu_custom_call.1} parent=59 // pred_check
          %p427 = pneg %p74
        $region66: #{tpu_custom_call.1} parent=59 // pred_check_branch
          %429 = sbr.rel (%p427) target = $region68
        $region67: #{tpu_custom_call.1} parent=59 // pred_region
          %430 = dma.done [#allocation6], 4096
        $region68: #{tpu_custom_call.1} parent=59 // pred_fallthru
          _
        // Predicated region
        $region69: #{tpu_custom_call.1} parent=59 // pred_check
          %p431 = pneg %p95
        $region70: #{tpu_custom_call.1} parent=59 // pred_check_branch
          %433 = sbr.rel (%p431) target = $region72
        $region71: #{tpu_custom_call.1} parent=59 // pred_region
          %434 = dma.done [#allocation6], 512
        $region72: #{tpu_custom_call.1} parent=59 // pred_fallthru
          _
        // Predicated region
        $region73: #{tpu_custom_call.1} parent=59 // pred_check
          %p435 = pneg %p116
        $region74: #{tpu_custom_call.1} parent=59 // pred_check_branch
          %437 = sbr.rel (%p435) target = $region76
        $region75: #{tpu_custom_call.1} parent=59 // pred_region
          %438 = dma.done [#allocation9], 512
        $region76: #{tpu_custom_call.1} parent=59 // pred_fallthru
          _
        // Predicated region
        $region77: #{tpu_custom_call.1} parent=59 // pred_check
          %p439 = pneg %p137
        $region78: #{tpu_custom_call.1} parent=59 // pred_check_branch
          %441 = sbr.rel (%p439) target = $region80
        $region79: #{tpu_custom_call.1} parent=59 // pred_region
          %442 = dma.done [#allocation9], 128
        $region80: #{tpu_custom_call.1} parent=59 // pred_fallthru
          _
        // Predicated region
        $region81: #{tpu_custom_call.1} parent=59 // pred_check
          %p443 = pneg %p158
        $region82: #{tpu_custom_call.1} parent=59 // pred_check_branch
          %445 = sbr.rel (%p443) target = $region84
        $region83: #{tpu_custom_call.1} parent=59 // pred_region
          %446 = dma.done [#allocation12], 128
        $region84: #{tpu_custom_call.1} parent=59 // pred_fallthru
          _
        // Predicated region
        $region85: #{tpu_custom_call.1} parent=59 // pred_check
          %p447 = pneg %p179
        $region86: #{tpu_custom_call.1} parent=59 // pred_check_branch
          %449 = sbr.rel (%p447) target = $region88
        $region87: #{tpu_custom_call.1} parent=59 // pred_region
          %450 = dma.done [#allocation12], 64
        $region88: #{tpu_custom_call.1} parent=59 // pred_fallthru
          _
        // Predicated region
        $region89: #{tpu_custom_call.1} parent=59 // pred_check
          %p451 = pneg %p200
        $region90: #{tpu_custom_call.1} parent=59 // pred_check_branch
          %453 = sbr.rel (%p451) target = $region92
        $region91: #{tpu_custom_call.1} parent=59 // pred_region
          %454 = dma.done [#allocation15], 64
        $region92: #{tpu_custom_call.1} parent=59 // pred_fallthru
          _
        // Predicated region
        $region93: #{tpu_custom_call.1} parent=59 // pred_check
          %p455 = pneg %p221
        $region94: #{tpu_custom_call.1} parent=59 // pred_check_branch
          %457 = sbr.rel (%p455) target = $region96
        $region95: #{tpu_custom_call.1} parent=59 // pred_region
          %458 = dma.done [#allocation15], 64
        $region96: #{tpu_custom_call.1} parent=59 // pred_fallthru
          _
        // Predicated region
        $region97: #{tpu_custom_call.1} parent=59 // pred_check
          %p459 = pneg %p242
        $region98: #{tpu_custom_call.1} parent=59 // pred_check_branch
          %461 = sbr.rel (%p459) target = $region100
        $region99: #{tpu_custom_call.1} parent=59 // pred_region
          %462 = dma.done [#allocation18], 64
        $region100: #{tpu_custom_call.1} parent=59 // pred_fallthru
          _
        %s463 = sand.u32 %s40, 1
        %s464 = scalar_lea.sflag [#allocation3], %s463
        %s465 = sand.u32 %s40, 1
        %s466 = smul.addr %s465, 8
        %s467 = scalar_lea.vmem [#allocation2], %s466
        %p468 = pneg %p53
        %p469 = pneg %p50
        %p470 = pneg %p74
        %p471 = pneg %p71
        %p472 = pneg %p95
        %p473 = pneg %p92
        %p474 = pneg %p116
        %p475 = pneg %p113
        %p476 = pneg %p137
        %p477 = pneg %p134
        %p478 = pneg %p158
        %p479 = pneg %p155
        %p480 = pneg %p179
        %p481 = pneg %p176
        %p482 = pneg %p200
        %p483 = pneg %p197
        %p484 = pneg %p221
        %p485 = pneg %p218
        %p486 = pneg %p242
        %p487 = pneg %p239
        %p488 = pneg %p268
        %p489 = pneg %p265
        %s490 = sand.u32 %s255, 1
        %s491 = scalar_lea.sflag [#allocation4], %s490
        %s492 = sand.u32 %s255, 1
        %s493 = smul.addr %s492, 8
        %s494 = scalar_lea.vmem [#allocation19], %s493
        %v495 = vld [vmem:[#allocation5] sm:$0xff]
        %v496 = vld [vmem:[#allocation5 + $0x8] sm:$0xff]
        %v497 = vld [vmem:[#allocation5 + $0x10] sm:$0xff]
        %v498 = vld [vmem:[#allocation5 + $0x18] sm:$0xff]
        %v499 = vld [vmem:[#allocation5 + $0x20] sm:$0xff]
        %v500 = vld [vmem:[#allocation5 + $0x28] sm:$0xff]
        %v501 = vld [vmem:[#allocation5 + $0x30] sm:$0xff]
        %v502 = vld [vmem:[#allocation5 + $0x38] sm:$0xff]
        %v503 = vld [vmem:[#allocation5 + $0x40] sm:$0xff]
        %v504 = vld [vmem:[#allocation5 + $0x48] sm:$0xff]
        %v505 = vld [vmem:[#allocation5 + $0x50] sm:$0xff]
        %v506 = vld [vmem:[#allocation5 + $0x58] sm:$0xff]
        %v507 = vld [vmem:[#allocation5 + $0x60] sm:$0xff]
        %v508 = vld [vmem:[#allocation5 + $0x68] sm:$0xff]
        %v509 = vld [vmem:[#allocation5 + $0x70] sm:$0xff]
        %v510 = vld [vmem:[#allocation5 + $0x78] sm:$0xff]
        %v511 = vld [vmem:[#allocation5 + $0x80] sm:$0xff]
        %v512 = vld [vmem:[#allocation5 + $0x88] sm:$0xff]
        %v513 = vld [vmem:[#allocation5 + $0x90] sm:$0xff]
        %v514 = vld [vmem:[#allocation5 + $0x98] sm:$0xff]
        %v515 = vld [vmem:[#allocation5 + $0xa0] sm:$0xff]
        %v516 = vld [vmem:[#allocation5 + $0xa8] sm:$0xff]
        %v517 = vld [vmem:[#allocation5 + $0xb0] sm:$0xff]
        %v518 = vld [vmem:[#allocation5 + $0xb8] sm:$0xff]
        %v519 = vld [vmem:[#allocation5 + $0xc0] sm:$0xff]
        %v520 = vld [vmem:[#allocation5 + $0xc8] sm:$0xff]
        %v521 = vld [vmem:[#allocation5 + $0xd0] sm:$0xff]
        %v522 = vld [vmem:[#allocation5 + $0xd8] sm:$0xff]
        %v523 = vld [vmem:[#allocation5 + $0xe0] sm:$0xff]
        %v524 = vld [vmem:[#allocation5 + $0xe8] sm:$0xff]
        %v525 = vld [vmem:[#allocation5 + $0xf0] sm:$0xff]
        %v526 = vld [vmem:[#allocation5 + $0xf8] sm:$0xff]
        %v527 = vld [vmem:[#allocation7] sm:$0xff]
        %v528 = vld [vmem:[#allocation7 + $0x8] sm:$0xff]
        %v529 = vld [vmem:[#allocation7 + $0x10] sm:$0xff]
        %v530 = vld [vmem:[#allocation7 + $0x18] sm:$0xff]
        %v531 = vld [vmem:[#allocation8] sm:$0xff]
        %v532 = vld [vmem:[#allocation8 + $0x8] sm:$0xff]
        %v533 = vld [vmem:[#allocation8 + $0x10] sm:$0xff]
        %v534 = vld [vmem:[#allocation8 + $0x18] sm:$0xff]
        %v535 = vld [vmem:[#allocation10] sm:$0xff]
        %v536 = vld [vmem:[#allocation11] sm:$0xff]
        %v537 = vld [vmem:[#allocation13] sm:$0xf]
        %v538 = vld [vmem:[#allocation14] sm:$0xf]
        %v539 = vld [vmem:[#allocation16] sm:$0xf]
        %v540 = vld [vmem:[#allocation17] sm:$0xf]
        %v541 = vld [vmem:[%s422] sm:$0xff]
        %v543 = vcombine.high %v541, %v541
        %545 = vmatprep.subr.mxu0 0.0
        %546 = vmatpush1.msra.mxu0 %v495
        %547 = vmatprep.subr.mxu0 0.0
        %548 = vmatpush1.msra.mxu0 %v496
        %549 = vmatprep.subr.mxu0 0.0
        %550 = vmatpush1.msra.mxu0 %v497
        %551 = vmatprep.subr.mxu0 0.0
        %552 = vmatpush1.msra.mxu0 %v498
        %553 = vmatprep.subr.mxu0 0.0
        %554 = vmatpush1.msra.mxu0 %v499
        %555 = vmatprep.subr.mxu0 0.0
        %556 = vmatpush1.msra.mxu0 %v500
        %557 = vmatprep.subr.mxu0 0.0
        %558 = vmatpush1.msra.mxu0 %v501
        %559 = vmatprep.subr.mxu0 0.0
        %560 = vmatpush1.msra.mxu0 %v502
        %561 = vmatprep.subr.mxu0 0.0
        %562 = vmatpush1.msra.mxu0 %v503
        %563 = vmatprep.subr.mxu0 0.0
        %564 = vmatpush1.msra.mxu0 %v504
        %565 = vmatprep.subr.mxu0 0.0
        %566 = vmatpush1.msra.mxu0 %v505
        %567 = vmatprep.subr.mxu0 0.0
        %568 = vmatpush1.msra.mxu0 %v506
        %569 = vmatprep.subr.mxu0 0.0
        %570 = vmatpush1.msra.mxu0 %v507
        %571 = vmatprep.subr.mxu0 0.0
        %572 = vmatpush1.msra.mxu0 %v508
        %573 = vmatprep.subr.mxu0 0.0
        %574 = vmatpush1.msra.mxu0 %v509
        %575 = vmatprep.subr.mxu0 0.0
        %576 = vmatpush1.msra.mxu0 %v510
        %577 = vmatprep.subr.mxu0 0.0
        %578 = vmatpush1.msra.mxu0 %v511
        %579 = vmatprep.subr.mxu0 0.0
        %580 = vmatpush1.msra.mxu0 %v512
        %581 = vmatprep.subr.mxu0 0.0
        %582 = vmatpush1.msra.mxu0 %v513
        %583 = vmatprep.subr.mxu0 0.0
        %584 = vmatpush1.msra.mxu0 %v514
        %585 = vmatprep.subr.mxu0 0.0
        %586 = vmatpush1.msra.mxu0 %v515
        %587 = vmatprep.subr.mxu0 0.0
        %588 = vmatpush1.msra.mxu0 %v516
        %589 = vmatprep.subr.mxu0 0.0
        %590 = vmatpush1.msra.mxu0 %v517
        %591 = vmatprep.subr.mxu0 0.0
        %592 = vmatpush1.msra.mxu0 %v518
        %593 = vmatprep.subr.mxu0 0.0
        %594 = vmatpush1.msra.mxu0 %v519
        %595 = vmatprep.subr.mxu0 0.0
        %596 = vmatpush1.msra.mxu0 %v520
        %597 = vmatprep.subr.mxu0 0.0
        %598 = vmatpush1.msra.mxu0 %v521
        %599 = vmatprep.subr.mxu0 0.0
        %600 = vmatpush1.msra.mxu0 %v522
        %601 = vmatprep.subr.mxu0 0.0
        %602 = vmatpush1.msra.mxu0 %v523
        %603 = vmatprep.subr.mxu0 0.0
        %604 = vmatpush1.msra.mxu0 %v524
        %605 = vmatprep.subr.mxu0 0.0
        %606 = vmatpush1.msra.mxu0 %v525
        %607 = vmatprep.subr.mxu0 0.0
        %608 = vmatpush1.msra.mxu0 %v526
        %609 = vmatprep.mubr.f32.mxu0 %v543
        %610 = vmatmul.mubr.f32.gmra.mrb[0].mxu0 %v541
        %v611 = vpop.f32.mrb[0].mxu0
        %v612 = vadd.f32 0.0, %v611
        %v613 = vpop.f32.mrb[0].mxu0
        %614 = vdwg.mxu0
        %616 = vset.pattern.permute.xlu0 0
        %617 = vperm.xlu0 %616, %v536
        %v618 = vpop.permute.xlu0 %617
        %vm620 = vcmask 31744
        %v622 = vsel %vm620, %v535, 0
        %vm624 = vcmask 1043456
        %v626 = vsel %vm624, %v612, 0
        %628 = vmatprep.subr.mxu0 0.0
        %629 = vmatpush1.msra.mxu0 %v626
        %630 = vmatprep.subr.mxu0 0.0
        %631 = vmatpush1.msra.mxu0 0.0
        %632 = vmatprep.subr.mxu0 0.0
        %633 = vmatpush1.msra.mxu0 0.0
        %634 = vmatprep.subr.mxu0 0.0
        %635 = vmatpush1.msra.mxu0 0.0
        %636 = vmatprep.subr.mxu0 0.0
        %637 = vmatpush1.msra.mxu0 0.0
        %638 = vmatprep.subr.mxu0 0.0
        %639 = vmatpush1.msra.mxu0 0.0
        %640 = vmatprep.subr.mxu0 0.0
        %641 = vmatpush1.msra.mxu0 0.0
        %642 = vmatprep.subr.mxu0 0.0
        %643 = vmatpush1.msra.mxu0 0.0
        %644 = vmatprep.subr.mxu0 0.0
        %645 = vmatpush1.msra.mxu0 0.0
        %646 = vmatprep.subr.mxu0 0.0
        %647 = vmatpush1.msra.mxu0 0.0
        %648 = vmatprep.subr.mxu0 0.0
        %649 = vmatpush1.msra.mxu0 0.0
        %650 = vmatprep.subr.mxu0 0.0
        %651 = vmatpush1.msra.mxu0 0.0
        %652 = vmatprep.subr.mxu0 0.0
        %653 = vmatpush1.msra.mxu0 0.0
        %654 = vmatprep.subr.mxu0 0.0
        %655 = vmatpush1.msra.mxu0 0.0
        %656 = vmatprep.subr.mxu0 0.0
        %657 = vmatpush1.msra.mxu0 0.0
        %658 = vmatprep.subr.mxu0 0.0
        %659 = vmatpush1.msra.mxu0 0.0
        %660 = vmatprep.subr.mxu0 0.0
        %661 = vmatpush1.msra.mxu0 0.0
        %662 = vmatprep.subr.mxu0 0.0
        %663 = vmatpush1.msra.mxu0 0.0
        %664 = vmatprep.subr.mxu0 0.0
        %665 = vmatpush1.msra.mxu0 0.0
        %666 = vmatprep.subr.mxu0 0.0
        %667 = vmatpush1.msra.mxu0 0.0
        %668 = vmatprep.subr.mxu0 0.0
        %669 = vmatpush1.msra.mxu0 0.0
        %670 = vmatprep.subr.mxu0 0.0
        %671 = vmatpush1.msra.mxu0 0.0
        %672 = vmatprep.subr.mxu0 0.0
        %673 = vmatpush1.msra.mxu0 0.0
        %674 = vmatprep.subr.mxu0 0.0
        %675 = vmatpush1.msra.mxu0 0.0
        %676 = vmatprep.subr.mxu0 0.0
        %677 = vmatpush1.msra.mxu0 0.0
        %678 = vmatprep.subr.mxu0 0.0
        %679 = vmatpush1.msra.mxu0 0.0
        %680 = vmatprep.subr.mxu0 0.0
        %681 = vmatpush1.msra.mxu0 0.0
        %682 = vmatprep.subr.mxu0 0.0
        %683 = vmatpush1.msra.mxu0 0.0
        %684 = vmatprep.subr.mxu0 0.0
        %685 = vmatpush1.msra.mxu0 0.0
        %686 = vmatprep.subr.mxu0 0.0
        %687 = vmatpush1.msra.mxu0 0.0
        %688 = vmatprep.subr.mxu0 0.0
        %689 = vmatpush1.msra.mxu0 0.0
        %690 = vmatprep.subr.mxu0 0.0
        %691 = vmatpush1.msra.mxu0 0.0
        %692 = vmatprep.mubr.f32.mxu0 0.0
        %693 = vmatmul.mubr.f32.gmra.mrb[0].mxu0 %v622
        %v694 = vpop.f32.mrb[0].mxu0
        %v695 = vadd.f32 %v618, %v694
        %v696 = vpop.f32.mrb[0].mxu0
        %697 = vdwg.mxu0
        %v698 = vadd.f32 %v695, 3.0
        %v699 = vmax.f32 %v698, 0.0
        %v700 = vmin.f32 %v699, 6.0
        %v701 = vmul.f32 %v700, 0.16666667
        %v702 = vmul.f32 %v695, %v701
        %704 = vset.pattern.permute.xlu0 0
        %705 = vperm.xlu0 %704, %v538
        %v706 = vpop.permute.xlu0 %705
        %vm708 = vcmask 64512
        %v710 = vsel %vm708, %v537, 0
        %712 = vmatprep.subr.mxu0 0.0
        %713 = vmatpush1.msra.mxu0 %v702
        %714 = vmatprep.subr.mxu0 0.0
        %715 = vmatpush1.msra.mxu0 0.0
        %716 = vmatprep.subr.mxu0 0.0
        %717 = vmatpush1.msra.mxu0 0.0
        %718 = vmatprep.subr.mxu0 0.0
        %719 = vmatpush1.msra.mxu0 0.0
        %720 = vmatprep.subr.mxu0 0.0
        %721 = vmatpush1.msra.mxu0 0.0
        %722 = vmatprep.subr.mxu0 0.0
        %723 = vmatpush1.msra.mxu0 0.0
        %724 = vmatprep.subr.mxu0 0.0
        %725 = vmatpush1.msra.mxu0 0.0
        %726 = vmatprep.subr.mxu0 0.0
        %727 = vmatpush1.msra.mxu0 0.0
        %728 = vmatprep.subr.mxu0 0.0
        %729 = vmatpush1.msra.mxu0 0.0
        %730 = vmatprep.subr.mxu0 0.0
        %731 = vmatpush1.msra.mxu0 0.0
        %732 = vmatprep.subr.mxu0 0.0
        %733 = vmatpush1.msra.mxu0 0.0
        %734 = vmatprep.subr.mxu0 0.0
        %735 = vmatpush1.msra.mxu0 0.0
        %736 = vmatprep.subr.mxu0 0.0
        %737 = vmatpush1.msra.mxu0 0.0
        %738 = vmatprep.subr.mxu0 0.0
        %739 = vmatpush1.msra.mxu0 0.0
        %740 = vmatprep.subr.mxu0 0.0
        %741 = vmatpush1.msra.mxu0 0.0
        %742 = vmatprep.subr.mxu0 0.0
        %743 = vmatpush1.msra.mxu0 0.0
        %744 = vmatprep.subr.mxu0 0.0
        %745 = vmatpush1.msra.mxu0 0.0
        %746 = vmatprep.subr.mxu0 0.0
        %747 = vmatpush1.msra.mxu0 0.0
        %748 = vmatprep.subr.mxu0 0.0
        %749 = vmatpush1.msra.mxu0 0.0
        %750 = vmatprep.subr.mxu0 0.0
        %751 = vmatpush1.msra.mxu0 0.0
        %752 = vmatprep.subr.mxu0 0.0
        %753 = vmatpush1.msra.mxu0 0.0
        %754 = vmatprep.subr.mxu0 0.0
        %755 = vmatpush1.msra.mxu0 0.0
        %756 = vmatprep.subr.mxu0 0.0
        %757 = vmatpush1.msra.mxu0 0.0
        %758 = vmatprep.subr.mxu0 0.0
        %759 = vmatpush1.msra.mxu0 0.0
        %760 = vmatprep.subr.mxu0 0.0
        %761 = vmatpush1.msra.mxu0 0.0
        %762 = vmatprep.subr.mxu0 0.0
        %763 = vmatpush1.msra.mxu0 0.0
        %764 = vmatprep.subr.mxu0 0.0
        %765 = vmatpush1.msra.mxu0 0.0
        %766 = vmatprep.subr.mxu0 0.0
        %767 = vmatpush1.msra.mxu0 0.0
        %768 = vmatprep.subr.mxu0 0.0
        %769 = vmatpush1.msra.mxu0 0.0
        %770 = vmatprep.subr.mxu0 0.0
        %771 = vmatpush1.msra.mxu0 0.0
        %772 = vmatprep.subr.mxu0 0.0
        %773 = vmatpush1.msra.mxu0 0.0
        %774 = vmatprep.subr.mxu0 0.0
        %775 = vmatpush1.msra.mxu0 0.0
        %776 = vmatprep.mubr.f32.mxu0 0.0
        %777 = vmatmul.mubr.f32.gmra.mrb[0].mxu0 %v710
        %v778 = vpop.f32.mrb[0].mxu0
        %v779 = vadd.f32 %v706, %v778
        %v780 = vpop.f32.mrb[0].mxu0
        %781 = vdwg.mxu0
        %v782 = vxor.u32 %v779, 2147483648
        %v783 = vmul.f32 %v782, 1.442695
        %v784 = vpow.pop %v783
        %v785 = vadd.f32 %v784, 1.0
        %v786 = vrcp.pop %v785
        %v787 = vmul.f32 1.0, %v786
        %789 = vset.pattern.permute.xlu0 0
        %790 = vperm.xlu0 %789, %v540
        %v791 = vpop.permute.xlu0 %790
        %794 = vrot.lane.b32.xlu0 %v702, 112
        %v795 = vpop.permute.xlu0 %794
        %v798 = vsel %vm708, %v539, 0
        %800 = vmatprep.subr.mxu0 0.0
        %801 = vmatpush1.msra.mxu0 %v795
        %802 = vmatprep.subr.mxu0 0.0
        %803 = vmatpush1.msra.mxu0 0.0
        %804 = vmatprep.subr.mxu0 0.0
        %805 = vmatpush1.msra.mxu0 0.0
        %806 = vmatprep.subr.mxu0 0.0
        %807 = vmatpush1.msra.mxu0 0.0
        %808 = vmatprep.subr.mxu0 0.0
        %809 = vmatpush1.msra.mxu0 0.0
        %810 = vmatprep.subr.mxu0 0.0
        %811 = vmatpush1.msra.mxu0 0.0
        %812 = vmatprep.subr.mxu0 0.0
        %813 = vmatpush1.msra.mxu0 0.0
        %814 = vmatprep.subr.mxu0 0.0
        %815 = vmatpush1.msra.mxu0 0.0
        %816 = vmatprep.subr.mxu0 0.0
        %817 = vmatpush1.msra.mxu0 0.0
        %818 = vmatprep.subr.mxu0 0.0
        %819 = vmatpush1.msra.mxu0 0.0
        %820 = vmatprep.subr.mxu0 0.0
        %821 = vmatpush1.msra.mxu0 0.0
        %822 = vmatprep.subr.mxu0 0.0
        %823 = vmatpush1.msra.mxu0 0.0
        %824 = vmatprep.subr.mxu0 0.0
        %825 = vmatpush1.msra.mxu0 0.0
        %826 = vmatprep.subr.mxu0 0.0
        %827 = vmatpush1.msra.mxu0 0.0
        %828 = vmatprep.subr.mxu0 0.0
        %829 = vmatpush1.msra.mxu0 0.0
        %830 = vmatprep.subr.mxu0 0.0
        %831 = vmatpush1.msra.mxu0 0.0
        %832 = vmatprep.subr.mxu0 0.0
        %833 = vmatpush1.msra.mxu0 0.0
        %834 = vmatprep.subr.mxu0 0.0
        %835 = vmatpush1.msra.mxu0 0.0
        %836 = vmatprep.subr.mxu0 0.0
        %837 = vmatpush1.msra.mxu0 0.0
        %838 = vmatprep.subr.mxu0 0.0
        %839 = vmatpush1.msra.mxu0 0.0
        %840 = vmatprep.subr.mxu0 0.0
        %841 = vmatpush1.msra.mxu0 0.0
        %842 = vmatprep.subr.mxu0 0.0
        %843 = vmatpush1.msra.mxu0 0.0
        %844 = vmatprep.subr.mxu0 0.0
        %845 = vmatpush1.msra.mxu0 0.0
        %846 = vmatprep.subr.mxu0 0.0
        %847 = vmatpush1.msra.mxu0 0.0
        %848 = vmatprep.subr.mxu0 0.0
        %849 = vmatpush1.msra.mxu0 0.0
        %850 = vmatprep.subr.mxu0 0.0
        %851 = vmatpush1.msra.mxu0 0.0
        %852 = vmatprep.subr.mxu0 0.0
        %853 = vmatpush1.msra.mxu0 0.0
        %854 = vmatprep.subr.mxu0 0.0
        %855 = vmatpush1.msra.mxu0 0.0
        %856 = vmatprep.subr.mxu0 0.0
        %857 = vmatpush1.msra.mxu0 0.0
        %858 = vmatprep.subr.mxu0 0.0
        %859 = vmatpush1.msra.mxu0 0.0
        %860 = vmatprep.subr.mxu0 0.0
        %861 = vmatpush1.msra.mxu0 0.0
        %862 = vmatprep.subr.mxu0 0.0
        %863 = vmatpush1.msra.mxu0 0.0
        %864 = vmatprep.mubr.f32.mxu0 0.0
        %865 = vmatmul.mubr.f32.gmra.mrb[0].mxu0 %v798
        %v866 = vpop.f32.mrb[0].mxu0
        %v867 = vadd.f32 %v791, %v866
        %v868 = vpop.f32.mrb[0].mxu0
        %869 = vdwg.mxu0
        %v870 = vxor.u32 %v867, 2147483648
        %v871 = vmul.f32 %v870, 1.442695
        %v872 = vpow.pop %v871
        %v873 = vadd.f32 %v872, 1.0
        %v874 = vrcp.pop %v873
        %v875 = vmul.f32 1.0, %v874
        %vm876 = vcmask 130048
        %v878 = vsel %vm876, %v787, 0
        %880 = vmatprep.subr.mxu0 %v528
        %881 = vmatpush1.msra.mxu0 %v527
        %882 = vmatprep.subr.mxu0 %v530
        %883 = vmatpush1.msra.mxu0 %v529
        %884 = vmatprep.subr.mxu0 0.0
        %885 = vmatpush1.msra.mxu0 0.0
        %886 = vmatprep.subr.mxu0 0.0
        %887 = vmatpush1.msra.mxu0 0.0
        %888 = vmatprep.subr.mxu0 0.0
        %889 = vmatpush1.msra.mxu0 0.0
        %890 = vmatprep.subr.mxu0 0.0
        %891 = vmatpush1.msra.mxu0 0.0
        %892 = vmatprep.subr.mxu0 0.0
        %893 = vmatpush1.msra.mxu0 0.0
        %894 = vmatprep.subr.mxu0 0.0
        %895 = vmatpush1.msra.mxu0 0.0
        %896 = vmatprep.subr.mxu0 0.0
        %897 = vmatpush1.msra.mxu0 0.0
        %898 = vmatprep.subr.mxu0 0.0
        %899 = vmatpush1.msra.mxu0 0.0
        %900 = vmatprep.subr.mxu0 0.0
        %901 = vmatpush1.msra.mxu0 0.0
        %902 = vmatprep.subr.mxu0 0.0
        %903 = vmatpush1.msra.mxu0 0.0
        %904 = vmatprep.subr.mxu0 0.0
        %905 = vmatpush1.msra.mxu0 0.0
        %906 = vmatprep.subr.mxu0 0.0
        %907 = vmatpush1.msra.mxu0 0.0
        %908 = vmatprep.subr.mxu0 0.0
        %909 = vmatpush1.msra.mxu0 0.0
        %910 = vmatprep.subr.mxu0 0.0
        %911 = vmatpush1.msra.mxu0 0.0
        %912 = vmatprep.subr.mxu0 0.0
        %913 = vmatpush1.msra.mxu0 0.0
        %914 = vmatprep.subr.mxu0 0.0
        %915 = vmatpush1.msra.mxu0 0.0
        %916 = vmatprep.subr.mxu0 0.0
        %917 = vmatpush1.msra.mxu0 0.0
        %918 = vmatprep.subr.mxu0 0.0
        %919 = vmatpush1.msra.mxu0 0.0
        %920 = vmatprep.subr.mxu0 0.0
        %921 = vmatpush1.msra.mxu0 0.0
        %922 = vmatprep.subr.mxu0 0.0
        %923 = vmatpush1.msra.mxu0 0.0
        %924 = vmatprep.subr.mxu0 0.0
        %925 = vmatpush1.msra.mxu0 0.0
        %926 = vmatprep.subr.mxu0 0.0
        %927 = vmatpush1.msra.mxu0 0.0
        %928 = vmatprep.subr.mxu0 0.0
        %929 = vmatpush1.msra.mxu0 0.0
        %930 = vmatprep.subr.mxu0 0.0
        %931 = vmatpush1.msra.mxu0 0.0
        %932 = vmatprep.subr.mxu0 0.0
        %933 = vmatpush1.msra.mxu0 0.0
        %934 = vmatprep.subr.mxu0 0.0
        %935 = vmatpush1.msra.mxu0 0.0
        %936 = vmatprep.subr.mxu0 0.0
        %937 = vmatpush1.msra.mxu0 0.0
        %938 = vmatprep.subr.mxu0 0.0
        %939 = vmatpush1.msra.mxu0 0.0
        %940 = vmatprep.subr.mxu0 0.0
        %941 = vmatpush1.msra.mxu0 0.0
        %942 = vmatprep.subr.mxu0 0.0
        %943 = vmatpush1.msra.mxu0 0.0
        %944 = vmatprep.mubr.f32.mxu0 0.0
        %945 = vmatmul.mubr.f32.gmra.mrb[0].mxu0 %v878
        %v946 = vpop.f32.mrb[0].mxu0
        %v947 = vadd.f32 0.0, %v946
        %v948 = vpop.f32.mrb[0].mxu0
        %v949 = vadd.f32 0.0, %v948
        %950 = vdwg.mxu0
        %v952 = vsel %vm876, %v875, 0
        %954 = vmatprep.subr.mxu0 %v532
        %955 = vmatpush1.msra.mxu0 %v531
        %956 = vmatprep.subr.mxu0 %v534
        %957 = vmatpush1.msra.mxu0 %v533
        %958 = vmatprep.subr.mxu0 0.0
        %959 = vmatpush1.msra.mxu0 0.0
        %960 = vmatprep.subr.mxu0 0.0
        %961 = vmatpush1.msra.mxu0 0.0
        %962 = vmatprep.subr.mxu0 0.0
        %963 = vmatpush1.msra.mxu0 0.0
        %964 = vmatprep.subr.mxu0 0.0
        %965 = vmatpush1.msra.mxu0 0.0
        %966 = vmatprep.subr.mxu0 0.0
        %967 = vmatpush1.msra.mxu0 0.0
        %968 = vmatprep.subr.mxu0 0.0
        %969 = vmatpush1.msra.mxu0 0.0
        %970 = vmatprep.subr.mxu0 0.0
        %971 = vmatpush1.msra.mxu0 0.0
        %972 = vmatprep.subr.mxu0 0.0
        %973 = vmatpush1.msra.mxu0 0.0
        %974 = vmatprep.subr.mxu0 0.0
        %975 = vmatpush1.msra.mxu0 0.0
        %976 = vmatprep.subr.mxu0 0.0
        %977 = vmatpush1.msra.mxu0 0.0
        %978 = vmatprep.subr.mxu0 0.0
        %979 = vmatpush1.msra.mxu0 0.0
        %980 = vmatprep.subr.mxu0 0.0
        %981 = vmatpush1.msra.mxu0 0.0
        %982 = vmatprep.subr.mxu0 0.0
        %983 = vmatpush1.msra.mxu0 0.0
        %984 = vmatprep.subr.mxu0 0.0
        %985 = vmatpush1.msra.mxu0 0.0
        %986 = vmatprep.subr.mxu0 0.0
        %987 = vmatpush1.msra.mxu0 0.0
        %988 = vmatprep.subr.mxu0 0.0
        %989 = vmatpush1.msra.mxu0 0.0
        %990 = vmatprep.subr.mxu0 0.0
        %991 = vmatpush1.msra.mxu0 0.0
        %992 = vmatprep.subr.mxu0 0.0
        %993 = vmatpush1.msra.mxu0 0.0
        %994 = vmatprep.subr.mxu0 0.0
        %995 = vmatpush1.msra.mxu0 0.0
        %996 = vmatprep.subr.mxu0 0.0
        %997 = vmatpush1.msra.mxu0 0.0
        %998 = vmatprep.subr.mxu0 0.0
        %999 = vmatpush1.msra.mxu0 0.0
        %1000 = vmatprep.subr.mxu0 0.0
        %1001 = vmatpush1.msra.mxu0 0.0
        %1002 = vmatprep.subr.mxu0 0.0
        %1003 = vmatpush1.msra.mxu0 0.0
        %1004 = vmatprep.subr.mxu0 0.0
        %1005 = vmatpush1.msra.mxu0 0.0
        %1006 = vmatprep.subr.mxu0 0.0
        %1007 = vmatpush1.msra.mxu0 0.0
        %1008 = vmatprep.subr.mxu0 0.0
        %1009 = vmatpush1.msra.mxu0 0.0
        %1010 = vmatprep.subr.mxu0 0.0
        %1011 = vmatpush1.msra.mxu0 0.0
        %1012 = vmatprep.subr.mxu0 0.0
        %1013 = vmatpush1.msra.mxu0 0.0
        %1014 = vmatprep.subr.mxu0 0.0
        %1015 = vmatpush1.msra.mxu0 0.0
        %1016 = vmatprep.subr.mxu0 0.0
        %1017 = vmatpush1.msra.mxu0 0.0
        %1018 = vmatprep.mubr.f32.mxu0 0.0
        %1019 = vmatmul.mubr.f32.gmra.mrb[0].mxu0 %v952
        %v1020 = vpop.f32.mrb[0].mxu0
        %v1021 = vadd.f32 0.0, %v1020
        %v1022 = vpop.f32.mrb[0].mxu0
        %v1023 = vadd.f32 0.0, %v1022
        %1024 = vdwg.mxu0
        %v1025 = vmul.f32 %v947, %v1021
        %v1026 = vmul.f32 %v949, %v1023
        %v1029 = vcombine.low %v1025, %v1026
        %v1031 = vmul.f32 %v541, %v1029
        %1032 = vst [vmem:[%s494] sm:$0xff] %v1031
        %s1033 = sand.u32 %s255, 1
        %s1034 = scalar_lea.sflag [#allocation4], %s1033
        %s1035 = sand.u32 %s255, 1
        %s1036 = smul.addr %s1035, 8
        %s1037 = scalar_lea.vmem [#allocation19], %s1036
        // Predicated region
        $region101: #{tpu_custom_call.1} parent=59 // pred_check
          %p1038 = pneg %p265
        $region102: #{tpu_custom_call.1} parent=59 // pred_check_branch
          %1040 = sbr.rel (%p1038) target = $region104
        $region103: #{tpu_custom_call.1} parent=59 // pred_region
          %s1042 = ssub.s32 128, 128
          %1043 = vsyncadd %s1034, %s1042
          %s1044 = smul.addr %s32, 2
          %s1045 = smul.addr %s1044, 64
          %s1046 = scalar_lea.hbm %s10, %s1045
          %s1048 = sshll.u32 %s1037, 4
          %s1049 = int_to_ptr.vmem [resolvable:$true] %s1048
          %1051 = dma.vmem_to_hbm [thread:$0]  %s1049, 128, %s1046, %s1034
        $region104: #{tpu_custom_call.1} parent=59 // pred_fallthru
          _
      $region60: #{tpu_custom_call.1} parent=5 // pred_fallthru
        _
      %p1052 = scmp.le.s32.totalorder 2, %s27
      // Predicated region
      $region105: #{tpu_custom_call.1} parent=5 // pred_check
        %p1053 = pneg %p1052
      $region106: #{tpu_custom_call.1} parent=5 // pred_check_branch
        %1055 = sbr.rel (%p1053) target = $region108
      $region107: #{tpu_custom_call.1} parent=5 // pred_region
        %s1056 = ssub.s32 %s27, 2
        // Predicated region
        $region109: #{tpu_custom_call.1} parent=107 // pred_check
          %p1057 = pneg %p271
        $region110: #{tpu_custom_call.1} parent=107 // pred_check_branch
          %1059 = sbr.rel (%p1057) target = $region112
        $region111: #{tpu_custom_call.1} parent=107 // pred_region
          %s1060 = sand.u32 %s256, 1
          %s1061 = scalar_lea.sflag [#allocation4], %s1060
          %s1062 = sand.u32 %s256, 1
          %s1063 = smul.addr %s1062, 8
          %s1064 = scalar_lea.vmem [#allocation19], %s1063
          %1065 = dma.done %s1061, 128
        $region112: #{tpu_custom_call.1} parent=107 // pred_fallthru
          _
      $region108: #{tpu_custom_call.1} parent=5 // pred_fallthru
        _
    $region6: #{tpu_custom_call.1} parent=1 // loop_footer
      %s31 = sadd.s32 1, %s27
    $region7: #{tpu_custom_call.1} parent=1 // loop_footer_branch
      %26 = sbr.rel target = $region3
    $region8: #{tpu_custom_call.1} parent=1 // loop_exit
      _
    %1066 = vsyncpa [#allocation3], 1
    %s1067 = scalar_lea.sflag [#allocation3], 1
    %1068 = vsyncpa %s1067, 1
    %1069 = vsyncpa [#allocation6], 1
    %1070 = vsyncpa [#allocation9], 1
    %1071 = vsyncpa [#allocation12], 1
    %1072 = vsyncpa [#allocation15], 1
    %1073 = vsyncpa [#allocation18], 1
    %1074 = vsyncpa [#allocation4], 1
    %s1075 = scalar_lea.sflag [#allocation4], 1
    %1076 = vsyncpa %s1075, 1

</llo_original>
